<compile_context>
chip_gen: v7x
topology: tpu7x:2x2x1
jax: 0.10.0
libtpu: 0.0.40
codegen_flags: <defaults>
</compile_context>

<pallas_src>
import functools
import math

import jax
import jax.numpy as jnp
import numpy as np
from jax.experimental import pallas as pl
from jax.experimental.pallas import tpu as pltpu


def _round_up(x, m):
    return (x + m - 1) // m * m


# ---------------------------------------------------------------------------
# Path A: small vocab -> whole table resident in VMEM, dynamic row loads.
# ---------------------------------------------------------------------------
def _embed_vmem_kernel(ids_ref, table_ref, out_ref, *, tm, scale):
    # ids_ref:   (n_pad,) int32 token ids in SMEM (scalar prefetch)
    # table_ref: (V, D)   full embedding table resident in VMEM
    # out_ref:   (tm, D)  output tile (pipeline-managed VMEM)
    base = pl.program_id(0) * tm

    @pl.loop(0, tm // 8)
    def _(g):
        r0 = pl.multiple_of(g * 8, 8)
        # 8 dynamic single-row gathers, assembled into one aligned (8, D) store.
        rows = [table_ref[pl.ds(ids_ref[base + r0 + u], 1), :] for u in range(8)]
        out_ref[pl.ds(r0, 8), :] = jnp.concatenate(rows, axis=0) * scale


# ---------------------------------------------------------------------------
# Path B: large vocab -> table stays in HBM; per-row DMA gather directly into
# the output tile, chunk-pipelined, one wait per chunk, in-place scale.
# ---------------------------------------------------------------------------
def _embed_dma_kernel(ids_ref, table_hbm, out_ref, sem, *, tm, n_chunks, unroll, scale):
    # ids_ref:   (n_pad,) int32 token ids in SMEM (scalar prefetch)
    # table_hbm: (V, D)   embedding table, left in HBM (pl.ANY)
    # out_ref:   (tm, D)  output tile; rows are DMA'd straight into it
    # sem:       (2,)     DMA semaphores (one per in-flight chunk)
    base = pl.program_id(0) * tm
    chunk = tm // n_chunks
    v = table_hbm.shape[0]

    def start_chunk(c, slot):
        row0 = c * chunk  # static

        @pl.loop(0, chunk // unroll)
        def _(g):
            for u in range(unroll):  # manual unroll: keeps the misc slot fed
                r = g * unroll + u
                tok = ids_ref[base + row0 + r]
                pltpu.make_async_copy(
                    table_hbm.at[pl.ds(tok, 1), :],        # (1, D) row in HBM
                    out_ref.at[pl.ds(row0 + r, 1), :],     # lands in output tile
                    sem.at[slot],
                ).start()

    def wait_chunk(c, slot):
        row0 = c * chunk
        dst = out_ref.at[pl.ds(row0, chunk), :]
        # Single wait sized to all `chunk` rows signaled on this semaphore.
        src = table_hbm.at[pl.ds(0, chunk), :] if chunk <= v else dst
        pltpu.make_async_copy(src, dst, sem.at[slot]).wait()

    # Chunk-pipelined: start c+1's row DMAs before waiting on chunk c.
    start_chunk(0, 0)
    for c in range(n_chunks):  # static, n_chunks <= 4
        if c + 1 < n_chunks:
            start_chunk(c + 1, (c + 1) % 2)
        wait_chunk(c, c % 2)
        row0 = c * chunk
        out_ref[pl.ds(row0, chunk), :] = out_ref[pl.ds(row0, chunk), :] * scale


# ---------------------------------------------------------------------------
# Wrapper
# ---------------------------------------------------------------------------
def input_embeddings(tokens, table, *, block_tokens=1024,
                     vmem_table_bytes=4 * 1024 * 1024):
    """tokens: (B, S) int; table: (V, D) -> (B, S, D) = table[tokens]*sqrt(D)."""
    b, s = tokens.shape
    v, d = table.shape
    n = b * s
    itemsize = table.dtype.itemsize
    scale = math.sqrt(float(d))  # == torch.sqrt(tensor(d_model, float32))

    # Token-tile size from a VMEM budget: double-buffered (tm, D) output must
    # stay well under the scoped limit (derived for v7x's 64 MiB VMEM).
    out_budget = 16 * 1024 * 1024
    tm_cap = max(8, (out_budget // (2 * d * itemsize)) // 8 * 8)
    tm = max(8, (min(block_tokens, tm_cap, _round_up(n, 8)) // 8) * 8)
    n_pad = _round_up(n, tm)

    ids = jnp.clip(tokens.reshape(n).astype(jnp.int32), 0, v - 1)
    if n_pad != n:
        # TODO(synk): padded tail tokens still gather row 0 (sliced off later);
        # skipping them would need a dynamically-sized DMA wait.
        ids = jnp.pad(ids, (0, n_pad - n))

    grid = (n_pad // tm,)
    common = dict(
        out_shape=jax.ShapeDtypeStruct((n_pad, d), table.dtype),
        compiler_params=pltpu.CompilerParams(
            dimension_semantics=("parallel",),     # megacore-shard token tiles
            vmem_limit_bytes=32 * 1024 * 1024,     # safe on v5e/v6e/v7x
        ),
    )

    if v * d * itemsize <= vmem_table_bytes:
        # Small vocab: whole table in VMEM, gather via dynamic VMEM loads.
        kernel = functools.partial(_embed_vmem_kernel, tm=tm, scale=scale)
        out = pl.pallas_call(
            kernel,
            grid_spec=pltpu.PrefetchScalarGridSpec(
                num_scalar_prefetch=1,                          # ids -> SMEM
                grid=grid,
                in_specs=[pl.BlockSpec((v, d), lambda i, ids: (0, 0))],
                out_specs=pl.BlockSpec((tm, d), lambda i, ids: (i, 0)),
            ),
            **common,
        )(ids, table)
    else:
        # Large vocab: table stays in HBM, per-row DMA gather into out_ref.
        if tm % 32 == 0 and tm >= 64:
            n_chunks = 4
        elif tm % 16 == 0 and tm >= 16:
            n_chunks = 2
        else:
            n_chunks = 1
        chunk = tm // n_chunks
        unroll = 8 if chunk % 8 == 0 else (4 if chunk % 4 == 0 else 1)
        kernel = functools.partial(_embed_dma_kernel, tm=tm, n_chunks=n_chunks,
                                   unroll=unroll, scale=scale)
        out = pl.pallas_call(
            kernel,
            grid_spec=pltpu.PrefetchScalarGridSpec(
                num_scalar_prefetch=1,                          # ids -> SMEM
                grid=grid,
                in_specs=[pl.BlockSpec(memory_space=pl.ANY)],   # table in HBM
                out_specs=pl.BlockSpec((tm, d), lambda i, ids: (i, 0)),
                scratch_shapes=[pltpu.SemaphoreType.DMA((2,))],
            ),
            **common,
        )(ids, table)

    return out[:n].reshape(b, s, d)


if __name__ == "__main__":
    vocab_size = 256
    d_model = 512          # module default
    batch, seq = 2, 8

    key = jax.random.PRNGKey(0)
    k_tok, k_emb = jax.random.split(key)

    # nn.Embedding default init is N(0, 1)
    table = jax.random.normal(k_emb, (vocab_size, d_model), dtype=jnp.float32)
    tokens = jax.random.randint(k_tok, (batch, seq), 0, vocab_size, dtype=jnp.int32)

    ref = np.asarray(table)[np.asarray(tokens)] * np.float32(math.sqrt(float(d_model)))

    # Path A (small vocab -> VMEM-resident table).
    out_vmem = jax.block_until_ready(input_embeddings(tokens, table))
    np.testing.assert_allclose(np.asarray(out_vmem), ref, rtol=1e-6, atol=1e-6)
    assert out_vmem.shape == (batch, seq, d_model) and out_vmem.dtype == jnp.float32

    # Path B (forced: HBM-resident table, chunk-pipelined per-row DMA gather).
    out_dma = jax.block_until_ready(
        input_embeddings(tokens, table, vmem_table_bytes=0))
    np.testing.assert_allclose(np.asarray(out_dma), ref, rtol=1e-6, atol=1e-6)

    print("KERNEL_OK")
</pallas_src>

<mosaic_0001>
module attributes {stable_mosaic.version = 11 : i64} {
  func.func @_embed_vmem_kernel(%arg0: i32, %arg1: memref<16xi32, #tpu.memory_space<smem>>, %arg2: memref<256x512xf32, #tpu.memory_space<vmem>>, %arg3: memref<16x512xf32, #tpu.memory_space<vmem>>) attributes {dimension_semantics = [#tpu.dimension_semantics<parallel>], iteration_bounds = array<i64: 1>, scalar_prefetch = 1 : i64, scratch_operands = 0 : i64, tpu.core_type = #tpu.core_type<tc>, window_params = [{pipeline_mode = #tpu.pipeline_mode<synchronous>, transform_indices = @transform_0, window_bounds = array<i64: 256, 512>}, {transform_indices = @transform_1, window_bounds = array<i64: 16, 512>}]} {
    %c16_i32 = arith.constant 16 : i32
    %0 = arith.muli %arg0, %c16_i32 : i32
    %c0_i32 = arith.constant 0 : i32
    %c2_i32 = arith.constant 2 : i32
    %1 = arith.addi %c0_i32, %c2_i32 : i32
    %c1_i32 = arith.constant 1 : i32
    scf.for %arg4 = %c0_i32 to %1 step %c1_i32  : i32 {
      %c1_i32_1 = arith.constant 1 : i32
      %2 = arith.muli %arg4, %c1_i32_1 : i32
      %c0_i32_2 = arith.constant 0 : i32
      %3 = arith.addi %c0_i32_2, %2 : i32
      %c8_i32 = arith.constant 8 : i32
      %4 = arith.muli %3, %c8_i32 : i32
      %5 = tpu.assume_multiple %4, 8 : i32
      %6 = arith.addi %0, %5 : i32
      %c0_i32_3 = arith.constant 0 : i32
      %7 = arith.addi %6, %c0_i32_3 : i32
      %8 = arith.index_cast %7 : i32 to index
      %9 = memref.load %arg1[%8] : memref<16xi32, #tpu.memory_space<smem>>
      %10 = arith.index_cast %9 : i32 to index
      %c0 = arith.constant 0 : index
      %11 = vector.load %arg2[%10, %c0] : memref<256x512xf32, #tpu.memory_space<vmem>>, vector<1x512xf32>
      %12 = arith.addi %0, %5 : i32
      %c1_i32_4 = arith.constant 1 : i32
      %13 = arith.addi %12, %c1_i32_4 : i32
      %14 = arith.index_cast %13 : i32 to index
      %15 = memref.load %arg1[%14] : memref<16xi32, #tpu.memory_space<smem>>
      %16 = arith.index_cast %15 : i32 to index
      %c0_5 = arith.constant 0 : index
      %17 = vector.load %arg2[%16, %c0_5] : memref<256x512xf32, #tpu.memory_space<vmem>>, vector<1x512xf32>
      %18 = arith.addi %0, %5 : i32
      %c2_i32_6 = arith.constant 2 : i32
      %19 = arith.addi %18, %c2_i32_6 : i32
      %20 = arith.index_cast %19 : i32 to index
      %21 = memref.load %arg1[%20] : memref<16xi32, #tpu.memory_space<smem>>
      %22 = arith.index_cast %21 : i32 to index
      %c0_7 = arith.constant 0 : index
      %23 = vector.load %arg2[%22, %c0_7] : memref<256x512xf32, #tpu.memory_space<vmem>>, vector<1x512xf32>
      %24 = arith.addi %0, %5 : i32
      %c3_i32 = arith.constant 3 : i32
      %25 = arith.addi %24, %c3_i32 : i32
      %26 = arith.index_cast %25 : i32 to index
      %27 = memref.load %arg1[%26] : memref<16xi32, #tpu.memory_space<smem>>
      %28 = arith.index_cast %27 : i32 to index
      %c0_8 = arith.constant 0 : index
      %29 = vector.load %arg2[%28, %c0_8] : memref<256x512xf32, #tpu.memory_space<vmem>>, vector<1x512xf32>
      %30 = arith.addi %0, %5 : i32
      %c4_i32 = arith.constant 4 : i32
      %31 = arith.addi %30, %c4_i32 : i32
      %32 = arith.index_cast %31 : i32 to index
      %33 = memref.load %arg1[%32] : memref<16xi32, #tpu.memory_space<smem>>
      %34 = arith.index_cast %33 : i32 to index
      %c0_9 = arith.constant 0 : index
      %35 = vector.load %arg2[%34, %c0_9] : memref<256x512xf32, #tpu.memory_space<vmem>>, vector<1x512xf32>
      %36 = arith.addi %0, %5 : i32
      %c5_i32 = arith.constant 5 : i32
      %37 = arith.addi %36, %c5_i32 : i32
      %38 = arith.index_cast %37 : i32 to index
      %39 = memref.load %arg1[%38] : memref<16xi32, #tpu.memory_space<smem>>
      %40 = arith.index_cast %39 : i32 to index
      %c0_10 = arith.constant 0 : index
      %41 = vector.load %arg2[%40, %c0_10] : memref<256x512xf32, #tpu.memory_space<vmem>>, vector<1x512xf32>
      %42 = arith.addi %0, %5 : i32
      %c6_i32 = arith.constant 6 : i32
      %43 = arith.addi %42, %c6_i32 : i32
      %44 = arith.index_cast %43 : i32 to index
      %45 = memref.load %arg1[%44] : memref<16xi32, #tpu.memory_space<smem>>
      %46 = arith.index_cast %45 : i32 to index
      %c0_11 = arith.constant 0 : index
      %47 = vector.load %arg2[%46, %c0_11] : memref<256x512xf32, #tpu.memory_space<vmem>>, vector<1x512xf32>
      %48 = arith.addi %0, %5 : i32
      %c7_i32 = arith.constant 7 : i32
      %49 = arith.addi %48, %c7_i32 : i32
      %50 = arith.index_cast %49 : i32 to index
      %51 = memref.load %arg1[%50] : memref<16xi32, #tpu.memory_space<smem>>
      %52 = arith.index_cast %51 : i32 to index
      %c0_12 = arith.constant 0 : index
      %53 = vector.load %arg2[%52, %c0_12] : memref<256x512xf32, #tpu.memory_space<vmem>>, vector<1x512xf32>
      %54 = tpu.concatenate %11, %17, %23, %29, %35, %41, %47, %53 in 0 : vector<1x512xf32>, vector<1x512xf32>, vector<1x512xf32>, vector<1x512xf32>, vector<1x512xf32>, vector<1x512xf32>, vector<1x512xf32>, vector<1x512xf32> -> vector<8x512xf32>
      %cst = arith.constant 22.6274166 : f32
      %55 = vector.broadcast %cst : f32 to vector<8x512xf32>
      %56 = arith.mulf %54, %55 : vector<8x512xf32>
      %57 = arith.index_cast %5 : i32 to index
      %c0_13 = arith.constant 0 : index
      %58 = vector.load %arg3[%57, %c0_13] : memref<16x512xf32, #tpu.memory_space<vmem>>, vector<8x512xf32>
      tpu.vector_store %arg3[%57, %c0_13], %56 {strides = array<i32>} : memref<16x512xf32, #tpu.memory_space<vmem>>, vector<8x512xf32>,
    }
    %c2_i32_0 = arith.constant 2 : i32
    return
  }
  func.func @transform_0(%arg0: i32, %arg1: memref<16xi32, #tpu.memory_space<smem>>) -> (i32, i32) {
    %c0_i32 = arith.constant 0 : i32
    %c0_i32_0 = arith.constant 0 : i32
    %c0_i32_1 = arith.constant 0 : i32
    return %c0_i32, %c0_i32_0 : i32, i32
  }
  func.func @transform_1(%arg0: i32, %arg1: memref<16xi32, #tpu.memory_space<smem>>) -> (i32, i32) {
    %c0_i32 = arith.constant 0 : i32
    %c0_i32_0 = arith.constant 0 : i32
    return %arg0, %c0_i32 : i32, i32
  }
}

</mosaic_0001>

<llo_original>
// kernel: tpu_custom_call.1
$region0: #{tpu_custom_call.1}
  #allocation0 [shape = 'u32[]', space=smem, size = 0x4, offset = 0x4, fixed_abs, tag = 'smem constant byte address 0x4 - core index']
  #allocation1 [shape = 'u32[144,128]{1,0:T(1,128)}', space=vmem, size = 0x12000, scoped, tag = 'internal scratch']
  #allocation2 [shape = 's32[1]{0}', space=sflag, size = 0x4, scoped, tag = 'scoped memory for tpu_custom_call.1']
  #allocation3 [shape = 'u8[512]{0}', space=smem, size = 0x200, scoped, tag = 'prefetched SMEM operand 0']
  %s0 = inlined_call_operand.hbm [shape: s32[16], index: 0, kind: input, shape index: {}]
  %s1 = inlined_call_operand.hbm [shape: f32[256,512], index: 1, kind: input, shape index: {}]
  %s2 = inlined_call_operand.hbm [shape: f32[16,512], index: 2, kind: output, shape index: {}]
  %s3 = sld [smem:[#allocation0]]
  $region25: #{tpu_custom_call.1} parent=0
    _
  %s5 = ssub.s32 1, %s3
  %s6 = scalar_select 0, %s5, %s3
  %8 = dma.hbm_to_smem %s0, 16, [#allocation3], [#allocation2]
  %9 = dma.done [#allocation2], 16
  %10 = sfence
  $region1: #{tpu_custom_call.1} parent=0
    #allocation4 [shape = 'u8[524288]{0}', space=vmem, size = 0x80000, scoped, tag = 'input window, operand 1, single buffered']
    #allocation5 [shape = 's32[1]{0}', space=sflag, size = 0x4, scoped, tag = 'scoped memory for tpu_custom_call.1']
    #allocation6 [shape = 's32[1]{0}', space=sflag, size = 0x4, scoped, tag = 'scoped memory for tpu_custom_call.1']
    #allocation7 [shape = 'u8[32768]{0}', space=vmem, size = 0x8000, scoped, tag = 'output window, operand 0, single buffered']
    %11 = vsyncpa [#allocation5], 0
    %12 = vsyncpa [#allocation6], 0
    // Predicated region
    $region2: #{tpu_custom_call.1} parent=1 // pred_check
      _
    $region3: #{tpu_custom_call.1} parent=1 // pred_check_branch
      %14 = sbr.rel (0) target = $region5
    $region4: #{tpu_custom_call.1} parent=1 // pred_region
      %s16 = ssub.s32 16384, 16384
      %17 = vsyncadd [#allocation5], %s16
      %s18 = sshll.u32 [#allocation4], 4
      %s19 = int_to_ptr.vmem [resolvable:$true] %s18
      %24 = dma.hbm_to_vmem [thread:$0]  %s1, 16384, %s19, [#allocation5], 512, 512, 32
    $region5: #{tpu_custom_call.1} parent=1 // pred_fallthru
      _
    // Predicated region
    $region6: #{tpu_custom_call.1} parent=1 // pred_check
      _
    $region7: #{tpu_custom_call.1} parent=1 // pred_check_branch
      %26 = sbr.rel (0) target = $region9
    $region8: #{tpu_custom_call.1} parent=1 // pred_region
      %27 = dma.done [#allocation5], 16384
    $region9: #{tpu_custom_call.1} parent=1 // pred_fallthru
      _
    %s28 = smul.u32 0, 16
    loop: start=0, step=1, limit=2
    $region10: #{tpu_custom_call.1} parent=1 // loop_pre_header
      _
    $region11: #{tpu_custom_call.1} parent=1 // loop_header
      %s30 = sphi 0, %s34
      %p31 = scmp.ge.s32.totalorder %s30, 2
    $region12: #{tpu_custom_call.1} parent=1 // loop_header_branch
      %33 = sbr.rel (%p31) target = $region16
    $region13: #{tpu_custom_call.1} parent=1 // loop_body
      %s35 = smul.u32 %s30, 8
      %s36 = sadd.s32 %s28, %s35
      %s37 = sld [smem:[#allocation3 + %s36]]
      %s38 = sshra.s32 %s37, 3
      %s39 = sand.u32 %s37, 7
      %s40 = sshra.s32 %s37, 3
      %s41 = sand.u32 %s37, 7
      %s42 = smul.u32 %s38, 4
      %s43 = smul.u32 %s42, 8
      %s44 = sadd.s32 %s43, %s41
      %s45 = scalar_lea.vmem [#allocation4], %s44
      %v46 = vld [vmem:[%s45] ss:$8 sm:$0xf]
      %s47 = sadd.s32 %s36, 1
      %s48 = sld [smem:[#allocation3 + %s47]]
      %s49 = sshra.s32 %s48, 3
      %s50 = sand.u32 %s48, 7
      %s51 = sshra.s32 %s48, 3
      %s52 = sand.u32 %s48, 7
      %s53 = smul.u32 %s49, 4
      %s54 = smul.u32 %s53, 8
      %s55 = sadd.s32 %s54, %s52
      %s56 = scalar_lea.vmem [#allocation4], %s55
      %v57 = vld [vmem:[%s56] ss:$8 sm:$0xf]
      %s58 = sadd.s32 %s36, 2
      %s59 = sld [smem:[#allocation3 + %s58]]
      %s60 = sshra.s32 %s59, 3
      %s61 = sand.u32 %s59, 7
      %s62 = sshra.s32 %s59, 3
      %s63 = sand.u32 %s59, 7
      %s64 = smul.u32 %s60, 4
      %s65 = smul.u32 %s64, 8
      %s66 = sadd.s32 %s65, %s63
      %s67 = scalar_lea.vmem [#allocation4], %s66
      %v68 = vld [vmem:[%s67] ss:$8 sm:$0xf]
      %s69 = sadd.s32 %s36, 3
      %s70 = sld [smem:[#allocation3 + %s69]]
      %s71 = sshra.s32 %s70, 3
      %s72 = sand.u32 %s70, 7
      %s73 = sshra.s32 %s70, 3
      %s74 = sand.u32 %s70, 7
      %s75 = smul.u32 %s71, 4
      %s76 = smul.u32 %s75, 8
      %s77 = sadd.s32 %s76, %s74
      %s78 = scalar_lea.vmem [#allocation4], %s77
      %v79 = vld [vmem:[%s78] ss:$8 sm:$0xf]
      %s80 = sadd.s32 %s36, 4
      %s81 = sld [smem:[#allocation3 + %s80]]
      %s82 = sshra.s32 %s81, 3
      %s83 = sand.u32 %s81, 7
      %s84 = sshra.s32 %s81, 3
      %s85 = sand.u32 %s81, 7
      %s86 = smul.u32 %s82, 4
      %s87 = smul.u32 %s86, 8
      %s88 = sadd.s32 %s87, %s85
      %s89 = scalar_lea.vmem [#allocation4], %s88
      %v90 = vld [vmem:[%s89] ss:$8 sm:$0xf]
      %s91 = sadd.s32 %s36, 5
      %s92 = sld [smem:[#allocation3 + %s91]]
      %s93 = sshra.s32 %s92, 3
      %s94 = sand.u32 %s92, 7
      %s95 = sshra.s32 %s92, 3
      %s96 = sand.u32 %s92, 7
      %s97 = smul.u32 %s93, 4
      %s98 = smul.u32 %s97, 8
      %s99 = sadd.s32 %s98, %s96
      %s100 = scalar_lea.vmem [#allocation4], %s99
      %v101 = vld [vmem:[%s100] ss:$8 sm:$0xf]
      %s102 = sadd.s32 %s36, 6
      %s103 = sld [smem:[#allocation3 + %s102]]
      %s104 = sshra.s32 %s103, 3
      %s105 = sand.u32 %s103, 7
      %s106 = sshra.s32 %s103, 3
      %s107 = sand.u32 %s103, 7
      %s108 = smul.u32 %s104, 4
      %s109 = smul.u32 %s108, 8
      %s110 = sadd.s32 %s109, %s107
      %s111 = scalar_lea.vmem [#allocation4], %s110
      %v112 = vld [vmem:[%s111] ss:$8 sm:$0xf]
      %s113 = sadd.s32 %s36, 7
      %s114 = sld [smem:[#allocation3 + %s113]]
      %s115 = sshra.s32 %s114, 3
      %s116 = sand.u32 %s114, 7
      %s117 = sshra.s32 %s114, 3
      %s118 = sand.u32 %s114, 7
      %s119 = smul.u32 %s115, 4
      %s120 = smul.u32 %s119, 8
      %s121 = sadd.s32 %s120, %s118
      %s122 = scalar_lea.vmem [#allocation4], %s121
      %v123 = vld [vmem:[%s122] ss:$8 sm:$0xf]
      %v125 = vlaneseq
      %v126 = vshrl.u32 %v125, 7
      %v127 = vsub.s32 0, %v126
      %v128 = vrot.slane %v46, %v127
      %v129 = vlaneseq
      %v130 = vshrl.u32 %v129, 7
      %v131 = vsub.s32 1, %v130
      %v132 = vrot.slane %v46, %v131
      %v133 = vlaneseq
      %v134 = vshrl.u32 %v133, 7
      %v135 = vsub.s32 2, %v134
      %v136 = vrot.slane %v46, %v135
      %v137 = vlaneseq
      %v138 = vshrl.u32 %v137, 7
      %v139 = vsub.s32 3, %v138
      %v140 = vrot.slane %v46, %v139
      %v146 = vlaneseq
      %v147 = vshrl.u32 %v146, 7
      %v148 = vsub.s32 0, %v147
      %v149 = vrot.slane %v57, %v148
      %v150 = vlaneseq
      %v151 = vshrl.u32 %v150, 7
      %v152 = vsub.s32 1, %v151
      %v153 = vrot.slane %v57, %v152
      %v154 = vlaneseq
      %v155 = vshrl.u32 %v154, 7
      %v156 = vsub.s32 2, %v155
      %v157 = vrot.slane %v57, %v156
      %v158 = vlaneseq
      %v159 = vshrl.u32 %v158, 7
      %v160 = vsub.s32 3, %v159
      %v161 = vrot.slane %v57, %v160
      %v167 = vlaneseq
      %v168 = vshrl.u32 %v167, 7
      %v169 = vsub.s32 0, %v168
      %v170 = vrot.slane %v68, %v169
      %v171 = vlaneseq
      %v172 = vshrl.u32 %v171, 7
      %v173 = vsub.s32 1, %v172
      %v174 = vrot.slane %v68, %v173
      %v175 = vlaneseq
      %v176 = vshrl.u32 %v175, 7
      %v177 = vsub.s32 2, %v176
      %v178 = vrot.slane %v68, %v177
      %v179 = vlaneseq
      %v180 = vshrl.u32 %v179, 7
      %v181 = vsub.s32 3, %v180
      %v182 = vrot.slane %v68, %v181
      %v188 = vlaneseq
      %v189 = vshrl.u32 %v188, 7
      %v190 = vsub.s32 0, %v189
      %v191 = vrot.slane %v79, %v190
      %v192 = vlaneseq
      %v193 = vshrl.u32 %v192, 7
      %v194 = vsub.s32 1, %v193
      %v195 = vrot.slane %v79, %v194
      %v196 = vlaneseq
      %v197 = vshrl.u32 %v196, 7
      %v198 = vsub.s32 2, %v197
      %v199 = vrot.slane %v79, %v198
      %v200 = vlaneseq
      %v201 = vshrl.u32 %v200, 7
      %v202 = vsub.s32 3, %v201
      %v203 = vrot.slane %v79, %v202
      %v209 = vlaneseq
      %v210 = vshrl.u32 %v209, 7
      %v211 = vsub.s32 0, %v210
      %v212 = vrot.slane %v90, %v211
      %v213 = vlaneseq
      %v214 = vshrl.u32 %v213, 7
      %v215 = vsub.s32 1, %v214
      %v216 = vrot.slane %v90, %v215
      %v217 = vlaneseq
      %v218 = vshrl.u32 %v217, 7
      %v219 = vsub.s32 2, %v218
      %v220 = vrot.slane %v90, %v219
      %v221 = vlaneseq
      %v222 = vshrl.u32 %v221, 7
      %v223 = vsub.s32 3, %v222
      %v224 = vrot.slane %v90, %v223
      %v230 = vlaneseq
      %v231 = vshrl.u32 %v230, 7
      %v232 = vsub.s32 0, %v231
      %v233 = vrot.slane %v101, %v232
      %v234 = vlaneseq
      %v235 = vshrl.u32 %v234, 7
      %v236 = vsub.s32 1, %v235
      %v237 = vrot.slane %v101, %v236
      %v238 = vlaneseq
      %v239 = vshrl.u32 %v238, 7
      %v240 = vsub.s32 2, %v239
      %v241 = vrot.slane %v101, %v240
      %v242 = vlaneseq
      %v243 = vshrl.u32 %v242, 7
      %v244 = vsub.s32 3, %v243
      %v245 = vrot.slane %v101, %v244
      %v251 = vlaneseq
      %v252 = vshrl.u32 %v251, 7
      %v253 = vsub.s32 0, %v252
      %v254 = vrot.slane %v112, %v253
      %v255 = vlaneseq
      %v256 = vshrl.u32 %v255, 7
      %v257 = vsub.s32 1, %v256
      %v258 = vrot.slane %v112, %v257
      %v259 = vlaneseq
      %v260 = vshrl.u32 %v259, 7
      %v261 = vsub.s32 2, %v260
      %v262 = vrot.slane %v112, %v261
      %v263 = vlaneseq
      %v264 = vshrl.u32 %v263, 7
      %v265 = vsub.s32 3, %v264
      %v266 = vrot.slane %v112, %v265
      %v272 = vlaneseq
      %v273 = vshrl.u32 %v272, 7
      %v274 = vsub.s32 0, %v273
      %v275 = vrot.slane %v123, %v274
      %v276 = vlaneseq
      %v277 = vshrl.u32 %v276, 7
      %v278 = vsub.s32 1, %v277
      %v279 = vrot.slane %v123, %v278
      %v280 = vlaneseq
      %v281 = vshrl.u32 %v280, 7
      %v282 = vsub.s32 2, %v281
      %v283 = vrot.slane %v123, %v282
      %v284 = vlaneseq
      %v285 = vshrl.u32 %v284, 7
      %v286 = vsub.s32 3, %v285
      %v287 = vrot.slane %v123, %v286
      %vm292 = vcmask 1040384
      %v293 = vsel %vm292, %v128, %v149
      %v294 = vsel %vm292, %v132, %v153
      %v295 = vsel %vm292, %v136, %v157
      %v296 = vsel %vm292, %v140, %v161
      %vm297 = vcmask 1041408
      %v298 = vsel %vm297, %v293, %v170
      %v299 = vsel %vm297, %v294, %v174
      %v300 = vsel %vm297, %v295, %v178
      %v301 = vsel %vm297, %v296, %v182
      %vm302 = vcmask 1042432
      %v303 = vsel %vm302, %v298, %v191
      %v304 = vsel %vm302, %v299, %v195
      %v305 = vsel %vm302, %v300, %v199
      %v306 = vsel %vm302, %v301, %v203
      %vm307 = vcmask 1043456
      %v308 = vsel %vm307, %v303, %v212
      %v309 = vsel %vm307, %v304, %v216
      %v310 = vsel %vm307, %v305, %v220
      %v311 = vsel %vm307, %v306, %v224
      %vm312 = vcmask 1044480
      %v313 = vsel %vm312, %v308, %v233
      %v314 = vsel %vm312, %v309, %v237
      %v315 = vsel %vm312, %v310, %v241
      %v316 = vsel %vm312, %v311, %v245
      %vm317 = vcmask 1045504
      %v318 = vsel %vm317, %v313, %v254
      %v319 = vsel %vm317, %v314, %v258
      %v320 = vsel %vm317, %v315, %v262
      %v321 = vsel %vm317, %v316, %v266
      %vm322 = vcmask 1046528
      %v323 = vsel %vm322, %v318, %v275
      %v324 = vsel %vm322, %v319, %v279
      %v325 = vsel %vm322, %v320, %v283
      %v326 = vsel %vm322, %v321, %v287
      %v327 = vmul.f32 %v323, 22.627417
      %v328 = vmul.f32 %v324, 22.627417
      %v329 = vmul.f32 %v325, 22.627417
      %v330 = vmul.f32 %v326, 22.627417
      %s331 = sshra.s32 %s35, 3
      %s332 = sand.u32 %s35, 7
      %s333 = smul.u32 %s331, 4
      %s334 = smul.addr %s333, 8
      %s335 = scalar_lea.vmem [#allocation7], %s334
      %336 = vst [vmem:[%s335] sm:$0xff] %v327
      %337 = vst [vmem:[%s335 + $0x8] sm:$0xff] %v328
      %338 = vst [vmem:[%s335 + $0x10] sm:$0xff] %v329
      %339 = vst [vmem:[%s335 + $0x18] sm:$0xff] %v330
    $region14: #{tpu_custom_call.1} parent=1 // loop_footer
      %s34 = sadd.s32 1, %s30
    $region15: #{tpu_custom_call.1} parent=1 // loop_footer_branch
      %29 = sbr.rel target = $region11
    $region16: #{tpu_custom_call.1} parent=1 // loop_exit
      _
    // Predicated region
    $region17: #{tpu_custom_call.1} parent=1 // pred_check
      _
    $region18: #{tpu_custom_call.1} parent=1 // pred_check_branch
      %341 = sbr.rel (0) target = $region20
    $region19: #{tpu_custom_call.1} parent=1 // pred_region
      %s343 = ssub.s32 1024, 1024
      %344 = vsyncadd [#allocation6], %s343
      %s345 = sshll.u32 [#allocation7], 4
      %s346 = int_to_ptr.vmem [resolvable:$true] %s345
      %351 = dma.vmem_to_hbm [thread:$0]  %s346, 1024, %s2, [#allocation6], 512, 512, 32
    $region20: #{tpu_custom_call.1} parent=1 // pred_fallthru
      _
    // Predicated region
    $region21: #{tpu_custom_call.1} parent=1 // pred_check
      _
    $region22: #{tpu_custom_call.1} parent=1 // pred_check_branch
      %353 = sbr.rel (0) target = $region24
    $region23: #{tpu_custom_call.1} parent=1 // pred_region
      %354 = dma.done [#allocation6], 1024
    $region24: #{tpu_custom_call.1} parent=1 // pred_fallthru
      _
    %355 = vsyncpa [#allocation5], 1
    %356 = vsyncpa [#allocation6], 1

</llo_original>
